<compile_context>
chip_gen: v6e
topology: v6e:2x2x1
jax: 0.10.0
libtpu: 0.0.40
codegen_flags: <defaults>
</compile_context>

<pallas_src>
import functools

import jax
import jax.numpy as jnp
from jax.experimental import pallas as pl
from jax.experimental.pallas import tpu as pltpu


# ----------------------------------------------------------------------------
# Helpers
# ----------------------------------------------------------------------------
def _round_up(v, m):
    return (v + m - 1) // m * m


def _pick_tile(n_pad, cap):
    """Largest multiple of 128 <= cap that divides n_pad (n_pad % 128 == 0)."""
    t = min(cap, n_pad)
    t = max(128, (t // 128) * 128)
    while n_pad % t:
        t -= 128
    return max(t, 128)


# ----------------------------------------------------------------------------
# Pallas kernels
# ----------------------------------------------------------------------------
def _proj_kernel(x_ref, w_ref, s1_ref, p_ref):
    """P = x_tile @ [w1 | w2 | 0 ...]  (MXU).  Outputs:
         s1 (f32, col 0 = x @ w1, kept full precision for the linear branch)
         P  (bf16, 128 lanes, col 1 = x @ w2) for the adjacency contraction."""
    p = jnp.dot(x_ref[...], w_ref[...], preferred_element_type=jnp.float32)  # (TM,128)
    s1_ref[...] = p[:, 0:1]
    p_ref[...] = p.astype(p_ref.dtype)


def _score_kernel(adj_ref, p_ref, s1_ref, bias_ref, score_ref, acc_ref, *, alpha):
    """score_tile = alpha*(x@w1) + (1-alpha)*(A_norm @ (x@w2)) + fused_bias.

    Grid = (row tiles [parallel], reduction tiles over N_pad [arbitrary]).
    adj_ref : (TM, TK) bf16 tile of the normalized adjacency
    p_ref   : (TK, 128) bf16 projection tile, col 1 = x@w2
    s1_ref  : (TM, 1) f32 = x_tile @ w1
    bias_ref: (1,) f32 in SMEM = alpha*b1 + (1-alpha)*b2
    acc_ref : (TM, 128) f32 VMEM accumulator, resident across the k axis
    """
    k = pl.program_id(1)

    @pl.when(k == 0)
    def _():
        acc_ref[...] = jnp.zeros_like(acc_ref)

    acc_ref[...] += jnp.dot(adj_ref[...], p_ref[...],
                            preferred_element_type=jnp.float32)   # MXU

    @pl.when(k == pl.num_programs(1) - 1)
    def _():
        score_ref[...] = (alpha * s1_ref[...]
                          + (1.0 - alpha) * acc_ref[:, 1:2]
                          + bias_ref[0])


# ----------------------------------------------------------------------------
# pallas_call wrapper
# ----------------------------------------------------------------------------
def compute_score(x, w1, b1, w2, b2, adj, alpha):
    """score = alpha*(x@w1 + b1) + (1-alpha)*(A_norm @ (x@w2) + b2), shape (N, 1)."""
    alpha = float(alpha)                      # hyperparameter -> baked constant
    n, c = x.shape
    n_pad = _round_up(n, 128)
    c_pad = _round_up(c, 128)
    tm = _pick_tile(n_pad, 512)               # row tile (parallel axis)
    tk = _pick_tile(n_pad, 1024)              # reduction tile (arbitrary axis)

    # Lane-dense zero padding (wrapper-side plumbing only).
    x_pad = jnp.zeros((n_pad, c_pad), jnp.float32).at[:n, :c].set(
        x.astype(jnp.float32))
    w_pad = jnp.zeros((c_pad, 128), jnp.float32)
    w_pad = w_pad.at[:c, 0].set(w1.reshape(-1).astype(jnp.float32))
    w_pad = w_pad.at[:c, 1].set(w2.reshape(-1).astype(jnp.float32))
    # Stream the big adjacency in bf16 (values in [0,1]; halves HBM traffic).
    adj_pad = jnp.zeros((n_pad, n_pad), jnp.bfloat16).at[:n, :n].set(
        adj.astype(jnp.bfloat16))
    fused_bias = (alpha * b1 + (1.0 - alpha) * b2).reshape(1).astype(jnp.float32)

    # --- projection kernel: P = x @ [w1 | w2 | 0...] ------------------------
    s1, p_bf16 = pl.pallas_call(
        _proj_kernel,
        grid=(n_pad // tm,),
        in_specs=[pl.BlockSpec((tm, c_pad), lambda i: (i, 0)),
                  pl.BlockSpec((c_pad, 128), lambda i: (0, 0))],
        out_specs=(pl.BlockSpec((tm, 1), lambda i: (i, 0)),
                   pl.BlockSpec((tm, 128), lambda i: (i, 0))),
        out_shape=(jax.ShapeDtypeStruct((n_pad, 1), jnp.float32),
                   jax.ShapeDtypeStruct((n_pad, 128), jnp.bfloat16)),
        compiler_params=pltpu.CompilerParams(
            dimension_semantics=("parallel",)),
        cost_estimate=pl.CostEstimate(
            flops=2 * n_pad * c_pad * 128,
            transcendentals=0,
            bytes_accessed=(n_pad * c_pad * 4 + c_pad * 128 * 4
                            + n_pad * 4 + n_pad * 128 * 2)),
    )(x_pad, w_pad)

    # --- score kernel: 2-D tiled adjacency contraction on the MXU -----------
    score_pad = pl.pallas_call(
        functools.partial(_score_kernel, alpha=alpha),
        grid=(n_pad // tm, n_pad // tk),
        in_specs=[pl.BlockSpec((tm, tk), lambda i, k: (i, k)),           # adj tile
                  pl.BlockSpec((tk, 128), lambda i, k: (k, 0)),          # P tile
                  pl.BlockSpec((tm, 1), lambda i, k: (i, 0)),            # s1 tile
                  pl.BlockSpec(memory_space=pltpu.MemorySpace.SMEM)],    # fused bias
        out_specs=pl.BlockSpec((tm, 1), lambda i, k: (i, 0)),
        out_shape=jax.ShapeDtypeStruct((n_pad, 1), jnp.float32),
        scratch_shapes=[pltpu.VMEM((tm, 128), jnp.float32)],
        compiler_params=pltpu.CompilerParams(
            dimension_semantics=("parallel", "arbitrary")),
        cost_estimate=pl.CostEstimate(
            flops=2 * n_pad * n_pad * 128,
            transcendentals=0,
            bytes_accessed=(n_pad * n_pad * 2
                            + (n_pad // tm) * n_pad * 128 * 2
                            + n_pad * 4 + n_pad * 4 + 4)),
    )(adj_pad, p_bf16, s1, fused_bias)

    return score_pad[:n]


# ----------------------------------------------------------------------------
# Plain-JAX glue (adjacency normalization, top-k, gating, edge filtering)
# ----------------------------------------------------------------------------
def build_gcn_norm_adj(edge_index, num_nodes):
    """Dense D^{-1/2} A D^{-1/2} with self-loops removed (add_self_loops=False)."""
    row, col = edge_index[0], edge_index[1]          # source, target (PyG order)
    w = (row != col).astype(jnp.float32)             # remove_self_loops
    deg = jnp.zeros((num_nodes,), jnp.float32).at[col].add(w)
    dinv = jnp.where(deg > 0, jax.lax.rsqrt(jnp.maximum(deg, 1e-12)), 0.0)
    norm = dinv[row] * dinv[col] * w
    adj = jnp.zeros((num_nodes, num_nodes), jnp.float32).at[col, row].add(norm)
    return adj


def topk_pool_forward(x, edge_index, w1, b1, w2, b2, alpha, ratio, flag=0):
    """Forward pass of Topk_pool for a single graph (batch = zeros)."""
    n = x.shape[0]
    adj = build_gcn_norm_adj(edge_index, n)

    score = compute_score(x, w1, b1, w2, b2, adj, alpha)      # (N, 1), Pallas
    if flag == 1:
        return score                                          # score.view(-1, 1)

    score_flat = score[:, 0]
    k = max(int(ratio * n), 1)
    if k >= n:
        perm = jnp.arange(n, dtype=jnp.int32)                 # torch keeps original order
    else:
        # TODO(synk): torch.topk is a sort; no clean Pallas primitive, use lax.top_k.
        _, perm = jax.lax.top_k(score_flat, k)                # descending by value

    # Gather + tanh gating left to XLA fusion (one pass over the k pooled rows).
    x_out = x[perm].astype(jnp.float32) * jnp.tanh(score_flat[perm])[:, None]
    batch_out = jnp.zeros((k,), jnp.int32)                    # batch[perm] (all-zero batch)

    # filter_adj / subgraph with relabeling.
    # TODO(synk): the torch version returns a variable-length edge_index; JAX
    # needs static shapes, so we return a fixed-size relabeled edge_index with
    # -1 padding plus a validity mask.
    in_perm = jnp.zeros((n,), bool).at[perm].set(True)
    new_id = jnp.full((n,), -1, jnp.int32).at[perm].set(jnp.arange(k, dtype=jnp.int32))
    row, col = edge_index[0], edge_index[1]
    edge_mask = in_perm[row] & in_perm[col]
    edge_index_new = jnp.where(edge_mask[None, :],
                               jnp.stack([new_id[row], new_id[col]]), -1)
    return x_out, edge_index_new, edge_mask, batch_out


# ----------------------------------------------------------------------------
# Demo / correctness check
# ----------------------------------------------------------------------------
if __name__ == "__main__":
    key = jax.random.PRNGKey(0)
    k_x, k_e, k_w1, k_b1, k_w2, k_b2 = jax.random.split(key, 6)

    N, C, E = 64, 32, 256
    ALPHA, RATIO = 0.5, 0.5

    x = jax.random.normal(k_x, (N, C), jnp.float32)
    edge_index = jax.random.randint(k_e, (2, E), 0, N, dtype=jnp.int32)

    # Synthetic parameters (score1: Linear(C,1); score2: GCNConv(C,1)).
    w1 = jax.random.normal(k_w1, (C,), jnp.float32) * 0.1
    b1 = jax.random.normal(k_b1, (), jnp.float32) * 0.1
    w2 = jax.random.normal(k_w2, (C,), jnp.float32) * 0.1
    b2 = jax.random.normal(k_b2, (), jnp.float32) * 0.1

    score_only = topk_pool_forward(x, edge_index, w1, b1, w2, b2, ALPHA, RATIO, flag=1)
    x_out, edge_index_new, edge_mask, batch_out = topk_pool_forward(
        x, edge_index, w1, b1, w2, b2, ALPHA, RATIO, flag=0)
    jax.block_until_ready((score_only, x_out, edge_index_new, edge_mask, batch_out))

    # Pure-JAX f32 reference for the Pallas-computed score (adj streamed as bf16
    # in the kernel, so tolerance is loosened accordingly).
    adj = build_gcn_norm_adj(edge_index, N)
    ref_score = ALPHA * (x @ w1 + b1) + (1.0 - ALPHA) * (adj @ (x @ w2) + b2)
    pallas_score = score_only[:, 0]
    assert pallas_score.shape == (N,)
    assert jnp.allclose(pallas_score, ref_score, atol=2e-2), "score mismatch"

    # Gating check with the perm implied by the Pallas score (avoids tie-break flakiness).
    k_nodes = max(int(RATIO * N), 1)
    _, perm = jax.lax.top_k(pallas_score, k_nodes)
    ref_x_out = x[perm] * jnp.tanh(ref_score[perm])[:, None]
    assert x_out.shape == (k_nodes, C)
    assert jnp.allclose(x_out, ref_x_out, atol=2e-2), "pooled output mismatch"

    print("KERNEL_OK")
</pallas_src>

<mosaic_0001>
module attributes {stable_mosaic.version = 11 : i64} {
  func.func @_proj_kernel(%arg0: i32, %arg1: memref<128x128xf32, #tpu.memory_space<vmem>>, %arg2: memref<128x128xf32, #tpu.memory_space<vmem>>, %arg3: memref<128x1xf32, #tpu.memory_space<vmem>>, %arg4: memref<128x128xbf16, #tpu.memory_space<vmem>>) attributes {dimension_semantics = [#tpu.dimension_semantics<parallel>], iteration_bounds = array<i64: 1>, scalar_prefetch = 0 : i64, scratch_operands = 0 : i64, tpu.core_type = #tpu.core_type<tc>, window_params = [{transform_indices = @transform_0, window_bounds = array<i64: 128, 128>}, {pipeline_mode = #tpu.pipeline_mode<synchronous>, transform_indices = @transform_1, window_bounds = array<i64: 128, 128>}, {transform_indices = @transform_2, window_bounds = array<i64: 128, 1>}, {transform_indices = @transform_3, window_bounds = array<i64: 128, 128>}]} {
    %c0 = arith.constant 0 : index
    %c0_0 = arith.constant 0 : index
    %0 = vector.load %arg1[%c0, %c0_0] : memref<128x128xf32, #tpu.memory_space<vmem>>, vector<128x128xf32>
    %c0_1 = arith.constant 0 : index
    %c0_2 = arith.constant 0 : index
    %1 = vector.load %arg2[%c0_1, %c0_2] : memref<128x128xf32, #tpu.memory_space<vmem>>, vector<128x128xf32>
    %cst = arith.constant dense<0.000000e+00> : vector<128x128xf32>
    %2 = tpu.matmul %0, %1, %cst {dimension_numbers = #tpu.dot_dimension_numbers<[1], [0], [0], [1], [0, 0, 1, 1], [], []>} : vector<128x128xf32>, vector<128x128xf32>, vector<128x128xf32> -> vector<128x128xf32>
    %3 = vector.extract_strided_slice %2 {offsets = [0, 0], sizes = [128, 1], strides = [1, 1]} : vector<128x128xf32> to vector<128x1xf32>
    %c0_3 = arith.constant 0 : index
    %c0_4 = arith.constant 0 : index
    %4 = vector.load %arg3[%c0_3, %c0_4] : memref<128x1xf32, #tpu.memory_space<vmem>>, vector<128x1xf32>
    tpu.vector_store %arg3[%c0_3, %c0_4], %3 {strides = array<i32>} : memref<128x1xf32, #tpu.memory_space<vmem>>, vector<128x1xf32>,
    %5 = arith.truncf %2 : vector<128x128xf32> to vector<128x128xbf16>
    %c0_5 = arith.constant 0 : index
    %c0_6 = arith.constant 0 : index
    %6 = vector.load %arg4[%c0_5, %c0_6] : memref<128x128xbf16, #tpu.memory_space<vmem>>, vector<128x128xbf16>
    tpu.vector_store %arg4[%c0_5, %c0_6], %5 {strides = array<i32>} : memref<128x128xbf16, #tpu.memory_space<vmem>>, vector<128x128xbf16>,
    return
  }
  func.func @transform_0(%arg0: i32) -> (i32, i32) {
    %c0_i32 = arith.constant 0 : i32
    %c0_i32_0 = arith.constant 0 : i32
    return %arg0, %c0_i32 : i32, i32
  }
  func.func @transform_1(%arg0: i32) -> (i32, i32) {
    %c0_i32 = arith.constant 0 : i32
    %c0_i32_0 = arith.constant 0 : i32
    %c0_i32_1 = arith.constant 0 : i32
    return %c0_i32, %c0_i32_0 : i32, i32
  }
  func.func @transform_2(%arg0: i32) -> (i32, i32) {
    %c0_i32 = arith.constant 0 : i32
    %c0_i32_0 = arith.constant 0 : i32
    return %arg0, %c0_i32 : i32, i32
  }
  func.func @transform_3(%arg0: i32) -> (i32, i32) {
    %c0_i32 = arith.constant 0 : i32
    %c0_i32_0 = arith.constant 0 : i32
    return %arg0, %c0_i32 : i32, i32
  }
}

</mosaic_0001>

<llo_original>
// kernel: tpu_custom_call.1
$region0: #{tpu_custom_call.1}
  #allocation0 [shape = 'u32[]', space=smem, size = 0x4, offset = 0x4, fixed_abs, tag = 'smem constant byte address 0x4 - core index']
  #allocation1 [shape = 'u32[144,128]{1,0:T(1,128)}', space=vmem, size = 0x12000, scoped, tag = 'internal scratch']
  %s0 = inlined_call_operand.hbm [shape: f32[128,128], index: 0, kind: input, shape index: {}]
  %s1 = inlined_call_operand.hbm [shape: f32[128,128], index: 1, kind: input, shape index: {}]
  %s2 = inlined_call_operand.vmem [shape: f32[128,1], index: 2, kind: output, shape index: {0}]
  %s3 = inlined_call_operand.hbm [shape: bf16[128,128], index: 3, kind: output, shape index: {1}]
  %4 = xla_tuple %s2, %s3
  %s5 = sld [smem:[#allocation0]]
  $region34: #{tpu_custom_call.1} parent=0
    _
  %s7 = ssub.s32 1, %s5
  %s8 = scalar_select 0, %s7, %s5
  $region1: #{tpu_custom_call.1} parent=0
    #allocation2 [shape = 'u8[65536]{0}', space=vmem, size = 0x10000, scoped, tag = 'input window, operand 0, single buffered']
    #allocation3 [shape = 's32[1]{0}', space=sflag, size = 0x4, scoped, tag = 'scoped memory for tpu_custom_call.1']
    #allocation4 [shape = 's32[1]{0}', space=sflag, size = 0x4, scoped, tag = 'scoped memory for tpu_custom_call.1']
    #allocation5 [shape = 'u8[65536]{0}', space=vmem, size = 0x10000, scoped, tag = 'input window, operand 1, single buffered']
    #allocation6 [shape = 's32[1]{0}', space=sflag, size = 0x4, scoped, tag = 'scoped memory for tpu_custom_call.1']
    #allocation7 [shape = 'u8[32768]{0}', space=vmem, size = 0x8000, scoped, tag = 'output window, operand 1, single buffered']
    %9 = vsyncpa [#allocation3], 0
    %10 = vsyncpa [#allocation6], 0
    %11 = vsyncpa [#allocation4], 0
    // Predicated region
    $region2: #{tpu_custom_call.1} parent=1 // pred_check
      _
    $region3: #{tpu_custom_call.1} parent=1 // pred_check_branch
      %13 = sbr.rel (0) target = $region5
    $region4: #{tpu_custom_call.1} parent=1 // pred_region
      %s15 = ssub.s32 2048, 2048
      %16 = vsyncadd [#allocation3], %s15
      %s17 = sshll.u32 [#allocation2], 4
      %s18 = int_to_ptr.vmem [resolvable:$true] %s17
      %23 = dma.hbm_to_vmem [thread:$0]  %s0, 2048, %s18, [#allocation3], 128, 128, 8
    $region5: #{tpu_custom_call.1} parent=1 // pred_fallthru
      _
    // Predicated region
    $region6: #{tpu_custom_call.1} parent=1 // pred_check
      _
    $region7: #{tpu_custom_call.1} parent=1 // pred_check_branch
      %25 = sbr.rel (0) target = $region9
    $region8: #{tpu_custom_call.1} parent=1 // pred_region
      %s27 = ssub.s32 2048, 2048
      %28 = vsyncadd [#allocation6], %s27
      %s29 = sshll.u32 [#allocation5], 4
      %s30 = int_to_ptr.vmem [resolvable:$true] %s29
      %35 = dma.hbm_to_vmem [thread:$0]  %s1, 2048, %s30, [#allocation6], 128, 128, 8
    $region9: #{tpu_custom_call.1} parent=1 // pred_fallthru
      _
    // Predicated region
    $region10: #{tpu_custom_call.1} parent=1 // pred_check
      _
    $region11: #{tpu_custom_call.1} parent=1 // pred_check_branch
      %37 = sbr.rel (0) target = $region13
    $region12: #{tpu_custom_call.1} parent=1 // pred_region
      %38 = dma.done [#allocation3], 2048
    $region13: #{tpu_custom_call.1} parent=1 // pred_fallthru
      _
    // Predicated region
    $region14: #{tpu_custom_call.1} parent=1 // pred_check
      _
    $region15: #{tpu_custom_call.1} parent=1 // pred_check_branch
      %40 = sbr.rel (0) target = $region17
    $region16: #{tpu_custom_call.1} parent=1 // pred_region
      %41 = dma.done [#allocation6], 2048
    $region17: #{tpu_custom_call.1} parent=1 // pred_fallthru
      _
    %v42 = vld [vmem:[#allocation2] sm:$0xff]
    %v43 = vld [vmem:[#allocation2 + $0x8] sm:$0xff]
    %v44 = vld [vmem:[#allocation2 + $0x10] sm:$0xff]
    %v45 = vld [vmem:[#allocation2 + $0x18] sm:$0xff]
    %v46 = vld [vmem:[#allocation2 + $0x20] sm:$0xff]
    %v47 = vld [vmem:[#allocation2 + $0x28] sm:$0xff]
    %v48 = vld [vmem:[#allocation2 + $0x30] sm:$0xff]
    %v49 = vld [vmem:[#allocation2 + $0x38] sm:$0xff]
    %v50 = vld [vmem:[#allocation2 + $0x40] sm:$0xff]
    %v51 = vld [vmem:[#allocation2 + $0x48] sm:$0xff]
    %v52 = vld [vmem:[#allocation2 + $0x50] sm:$0xff]
    %v53 = vld [vmem:[#allocation2 + $0x58] sm:$0xff]
    %v54 = vld [vmem:[#allocation2 + $0x60] sm:$0xff]
    %v55 = vld [vmem:[#allocation2 + $0x68] sm:$0xff]
    %v56 = vld [vmem:[#allocation2 + $0x70] sm:$0xff]
    %v57 = vld [vmem:[#allocation2 + $0x78] sm:$0xff]
    %v58 = vld [vmem:[#allocation5] sm:$0xff]
    %v59 = vld [vmem:[#allocation5 + $0x8] sm:$0xff]
    %v60 = vld [vmem:[#allocation5 + $0x10] sm:$0xff]
    %v61 = vld [vmem:[#allocation5 + $0x18] sm:$0xff]
    %v62 = vld [vmem:[#allocation5 + $0x20] sm:$0xff]
    %v63 = vld [vmem:[#allocation5 + $0x28] sm:$0xff]
    %v64 = vld [vmem:[#allocation5 + $0x30] sm:$0xff]
    %v65 = vld [vmem:[#allocation5 + $0x38] sm:$0xff]
    %v66 = vld [vmem:[#allocation5 + $0x40] sm:$0xff]
    %v67 = vld [vmem:[#allocation5 + $0x48] sm:$0xff]
    %v68 = vld [vmem:[#allocation5 + $0x50] sm:$0xff]
    %v69 = vld [vmem:[#allocation5 + $0x58] sm:$0xff]
    %v70 = vld [vmem:[#allocation5 + $0x60] sm:$0xff]
    %v71 = vld [vmem:[#allocation5 + $0x68] sm:$0xff]
    %v72 = vld [vmem:[#allocation5 + $0x70] sm:$0xff]
    %v73 = vld [vmem:[#allocation5 + $0x78] sm:$0xff]
    %74 = vmatprep.subr.mxu0 0.0
    %75 = vmatpush1.msra.mxu0 %v73
    %76 = vmatprep.subr.mxu0 0.0
    %77 = vmatpush1.msra.mxu0 %v72
    %78 = vmatprep.subr.mxu0 0.0
    %79 = vmatpush1.msra.mxu0 %v71
    %80 = vmatprep.subr.mxu0 0.0
    %81 = vmatpush1.msra.mxu0 %v70
    %82 = vmatprep.subr.mxu0 0.0
    %83 = vmatpush1.msra.mxu0 %v69
    %84 = vmatprep.subr.mxu0 0.0
    %85 = vmatpush1.msra.mxu0 %v68
    %86 = vmatprep.subr.mxu0 0.0
    %87 = vmatpush1.msra.mxu0 %v67
    %88 = vmatprep.subr.mxu0 0.0
    %89 = vmatpush1.msra.mxu0 %v66
    %90 = vmatprep.subr.mxu0 0.0
    %91 = vmatpush1.msra.mxu0 %v65
    %92 = vmatprep.subr.mxu0 0.0
    %93 = vmatpush1.msra.mxu0 %v64
    %94 = vmatprep.subr.mxu0 0.0
    %95 = vmatpush1.msra.mxu0 %v63
    %96 = vmatprep.subr.mxu0 0.0
    %97 = vmatpush1.msra.mxu0 %v62
    %98 = vmatprep.subr.mxu0 0.0
    %99 = vmatpush1.msra.mxu0 %v61
    %100 = vmatprep.subr.mxu0 0.0
    %101 = vmatpush1.msra.mxu0 %v60
    %102 = vmatprep.subr.mxu0 0.0
    %103 = vmatpush1.msra.mxu0 %v59
    %104 = vmatprep.subr.mxu0 0.0
    %105 = vmatpush1.msra.mxu0 %v58
    %106 = vmatprep.subr.mxu0 0.0
    %107 = vmatpush2.msra.mxu0 0.0
    %108 = vmatprep.subr.mxu0 0.0
    %109 = vmatpush2.msra.mxu0 0.0
    %110 = vmatprep.subr.mxu0 0.0
    %111 = vmatpush2.msra.mxu0 0.0
    %112 = vmatprep.subr.mxu0 0.0
    %113 = vmatpush2.msra.mxu0 0.0
    %114 = vmatprep.subr.mxu0 0.0
    %115 = vmatpush2.msra.mxu0 0.0
    %116 = vmatprep.subr.mxu0 0.0
    %117 = vmatpush2.msra.mxu0 0.0
    %118 = vmatprep.subr.mxu0 0.0
    %119 = vmatpush2.msra.mxu0 0.0
    %120 = vmatprep.subr.mxu0 0.0
    %121 = vmatpush2.msra.mxu0 0.0
    %122 = vmatprep.subr.mxu0 0.0
    %123 = vmatpush2.msra.mxu0 0.0
    %124 = vmatprep.subr.mxu0 0.0
    %125 = vmatpush2.msra.mxu0 0.0
    %126 = vmatprep.subr.mxu0 0.0
    %127 = vmatpush2.msra.mxu0 0.0
    %128 = vmatprep.subr.mxu0 0.0
    %129 = vmatpush2.msra.mxu0 0.0
    %130 = vmatprep.subr.mxu0 0.0
    %131 = vmatpush2.msra.mxu0 0.0
    %132 = vmatprep.subr.mxu0 0.0
    %133 = vmatpush2.msra.mxu0 0.0
    %134 = vmatprep.subr.mxu0 0.0
    %135 = vmatpush2.msra.mxu0 0.0
    %136 = vmatprep.subr.mxu0 0.0
    %137 = vmatpush2.msra.mxu0 0.0
    %138 = vmatprep.mubr.f32.mxu0 0.0
    %139 = vmatmul.mubr.f32.gmra.mxu0 %v42
    %v140 = vpop.f32.mrf.mxu0
    %v141 = vadd.f32 0.0, %v140
    %v142 = vpop.f32.mrf.mxu0
    %143 = vmatprep.mubr.f32.mxu0 0.0
    %144 = vmatmul.mubr.f32.gmra.mxu0 %v43
    %v145 = vpop.f32.mrf.mxu0
    %v146 = vadd.f32 0.0, %v145
    %v147 = vpop.f32.mrf.mxu0
    %148 = vmatprep.mubr.f32.mxu0 0.0
    %149 = vmatmul.mubr.f32.gmra.mxu0 %v44
    %v150 = vpop.f32.mrf.mxu0
    %v151 = vadd.f32 0.0, %v150
    %v152 = vpop.f32.mrf.mxu0
    %153 = vmatprep.mubr.f32.mxu0 0.0
    %154 = vmatmul.mubr.f32.gmra.mxu0 %v45
    %v155 = vpop.f32.mrf.mxu0
    %v156 = vadd.f32 0.0, %v155
    %v157 = vpop.f32.mrf.mxu0
    %158 = vmatprep.mubr.f32.mxu0 0.0
    %159 = vmatmul.mubr.f32.gmra.mxu0 %v46
    %v160 = vpop.f32.mrf.mxu0
    %v161 = vadd.f32 0.0, %v160
    %v162 = vpop.f32.mrf.mxu0
    %163 = vmatprep.mubr.f32.mxu0 0.0
    %164 = vmatmul.mubr.f32.gmra.mxu0 %v47
    %v165 = vpop.f32.mrf.mxu0
    %v166 = vadd.f32 0.0, %v165
    %v167 = vpop.f32.mrf.mxu0
    %168 = vmatprep.mubr.f32.mxu0 0.0
    %169 = vmatmul.mubr.f32.gmra.mxu0 %v48
    %v170 = vpop.f32.mrf.mxu0
    %v171 = vadd.f32 0.0, %v170
    %v172 = vpop.f32.mrf.mxu0
    %173 = vmatprep.mubr.f32.mxu0 0.0
    %174 = vmatmul.mubr.f32.gmra.mxu0 %v49
    %v175 = vpop.f32.mrf.mxu0
    %v176 = vadd.f32 0.0, %v175
    %v177 = vpop.f32.mrf.mxu0
    %178 = vmatprep.mubr.f32.mxu0 0.0
    %179 = vmatmul.mubr.f32.gmra.mxu0 %v50
    %v180 = vpop.f32.mrf.mxu0
    %v181 = vadd.f32 0.0, %v180
    %v182 = vpop.f32.mrf.mxu0
    %183 = vmatprep.mubr.f32.mxu0 0.0
    %184 = vmatmul.mubr.f32.gmra.mxu0 %v51
    %v185 = vpop.f32.mrf.mxu0
    %v186 = vadd.f32 0.0, %v185
    %v187 = vpop.f32.mrf.mxu0
    %188 = vmatprep.mubr.f32.mxu0 0.0
    %189 = vmatmul.mubr.f32.gmra.mxu0 %v52
    %v190 = vpop.f32.mrf.mxu0
    %v191 = vadd.f32 0.0, %v190
    %v192 = vpop.f32.mrf.mxu0
    %193 = vmatprep.mubr.f32.mxu0 0.0
    %194 = vmatmul.mubr.f32.gmra.mxu0 %v53
    %v195 = vpop.f32.mrf.mxu0
    %v196 = vadd.f32 0.0, %v195
    %v197 = vpop.f32.mrf.mxu0
    %198 = vmatprep.mubr.f32.mxu0 0.0
    %199 = vmatmul.mubr.f32.gmra.mxu0 %v54
    %v200 = vpop.f32.mrf.mxu0
    %v201 = vadd.f32 0.0, %v200
    %v202 = vpop.f32.mrf.mxu0
    %203 = vmatprep.mubr.f32.mxu0 0.0
    %204 = vmatmul.mubr.f32.gmra.mxu0 %v55
    %v205 = vpop.f32.mrf.mxu0
    %v206 = vadd.f32 0.0, %v205
    %v207 = vpop.f32.mrf.mxu0
    %208 = vmatprep.mubr.f32.mxu0 0.0
    %209 = vmatmul.mubr.f32.gmra.mxu0 %v56
    %v210 = vpop.f32.mrf.mxu0
    %v211 = vadd.f32 0.0, %v210
    %v212 = vpop.f32.mrf.mxu0
    %213 = vmatprep.mubr.f32.mxu0 0.0
    %214 = vmatmul.mubr.f32.gmra.mxu0 %v57
    %v215 = vpop.f32.mrf.mxu0
    %v216 = vadd.f32 0.0, %v215
    %v217 = vpop.f32.mrf.mxu0
    %218 = vdwg.mxu0
    %vm219 = vcmask 7168
    %220 = vst.msk [vmem:[%s2] sm:$0xff] %vm219, %v141
    %221 = vst.msk [vmem:[%s2 + $0x8] sm:$0xff] %vm219, %v146
    %222 = vst.msk [vmem:[%s2 + $0x10] sm:$0xff] %vm219, %v151
    %223 = vst.msk [vmem:[%s2 + $0x18] sm:$0xff] %vm219, %v156
    %224 = vst.msk [vmem:[%s2 + $0x20] sm:$0xff] %vm219, %v161
    %225 = vst.msk [vmem:[%s2 + $0x28] sm:$0xff] %vm219, %v166
    %226 = vst.msk [vmem:[%s2 + $0x30] sm:$0xff] %vm219, %v171
    %227 = vst.msk [vmem:[%s2 + $0x38] sm:$0xff] %vm219, %v176
    %228 = vst.msk [vmem:[%s2 + $0x40] sm:$0xff] %vm219, %v181
    %229 = vst.msk [vmem:[%s2 + $0x48] sm:$0xff] %vm219, %v186
    %230 = vst.msk [vmem:[%s2 + $0x50] sm:$0xff] %vm219, %v191
    %231 = vst.msk [vmem:[%s2 + $0x58] sm:$0xff] %vm219, %v196
    %232 = vst.msk [vmem:[%s2 + $0x60] sm:$0xff] %vm219, %v201
    %233 = vst.msk [vmem:[%s2 + $0x68] sm:$0xff] %vm219, %v206
    %234 = vst.msk [vmem:[%s2 + $0x70] sm:$0xff] %vm219, %v211
    %235 = vst.msk [vmem:[%s2 + $0x78] sm:$0xff] %vm219, %v216
    %v236 = vpack.c.bf16 %v146, %v141
    %v237 = vpack.c.bf16 %v156, %v151
    %v238 = vpack.c.bf16 %v166, %v161
    %v239 = vpack.c.bf16 %v176, %v171
    %v240 = vpack.c.bf16 %v186, %v181
    %v241 = vpack.c.bf16 %v196, %v191
    %v242 = vpack.c.bf16 %v206, %v201
    %v243 = vpack.c.bf16 %v216, %v211
    %v252 = vunpack.c.l.b16 %v236
    %v253 = vunpack.c.h.b16 %v236
    %v254 = vunpack.c.l.b16 %v237
    %v255 = vunpack.c.h.b16 %v237
    %v256 = vunpack.c.l.b16 %v238
    %v257 = vunpack.c.h.b16 %v238
    %v258 = vunpack.c.l.b16 %v239
    %v259 = vunpack.c.h.b16 %v239
    %v260 = vunpack.c.l.b16 %v240
    %v261 = vunpack.c.h.b16 %v240
    %v262 = vunpack.c.l.b16 %v241
    %v263 = vunpack.c.h.b16 %v241
    %v264 = vunpack.c.l.b16 %v242
    %v265 = vunpack.c.h.b16 %v242
    %v266 = vunpack.c.l.b16 %v243
    %v267 = vunpack.c.h.b16 %v243
    %v268 = vpack.c.b16 %v252, %v252
    %v269 = vpack.c.b16 %v253, %v253
    %v270 = vpack.c.b16 %v254, %v254
    %v271 = vpack.c.b16 %v255, %v255
    %v272 = vpack.c.b16 %v256, %v256
    %v273 = vpack.c.b16 %v257, %v257
    %v274 = vpack.c.b16 %v258, %v258
    %v275 = vpack.c.b16 %v259, %v259
    %v276 = vpack.c.b16 %v260, %v260
    %v277 = vpack.c.b16 %v261, %v261
    %v278 = vpack.c.b16 %v262, %v262
    %v279 = vpack.c.b16 %v263, %v263
    %v280 = vpack.c.b16 %v264, %v264
    %v281 = vpack.c.b16 %v265, %v265
    %v282 = vpack.c.b16 %v266, %v266
    %v283 = vpack.c.b16 %v267, %v267
    %300 = vst [vmem:[#allocation7] sm:$0xf] %v268
    %301 = vst [vmem:[#allocation7 + $0x4] sm:$0xf] %v269
    %302 = vst [vmem:[#allocation7 + $0x8] sm:$0xf] %v270
    %303 = vst [vmem:[#allocation7 + $0xc] sm:$0xf] %v271
    %304 = vst [vmem:[#allocation7 + $0x10] sm:$0xf] %v272
    %305 = vst [vmem:[#allocation7 + $0x14] sm:$0xf] %v273
    %306 = vst [vmem:[#allocation7 + $0x18] sm:$0xf] %v274
    %307 = vst [vmem:[#allocation7 + $0x1c] sm:$0xf] %v275
    %308 = vst [vmem:[#allocation7 + $0x20] sm:$0xf] %v276
    %309 = vst [vmem:[#allocation7 + $0x24] sm:$0xf] %v277
    %310 = vst [vmem:[#allocation7 + $0x28] sm:$0xf] %v278
    %311 = vst [vmem:[#allocation7 + $0x2c] sm:$0xf] %v279
    %312 = vst [vmem:[#allocation7 + $0x30] sm:$0xf] %v280
    %313 = vst [vmem:[#allocation7 + $0x34] sm:$0xf] %v281
    %314 = vst [vmem:[#allocation7 + $0x38] sm:$0xf] %v282
    %315 = vst [vmem:[#allocation7 + $0x3c] sm:$0xf] %v283
    // Predicated region
    $region18: #{tpu_custom_call.1} parent=1 // pred_check
      _
    $region19: #{tpu_custom_call.1} parent=1 // pred_check_branch
      %317 = sbr.rel (0) target = $region21
    $region20: #{tpu_custom_call.1} parent=1 // pred_region
      _
    $region21: #{tpu_custom_call.1} parent=1 // pred_fallthru
      _
    // Predicated region
    $region22: #{tpu_custom_call.1} parent=1 // pred_check
      _
    $region23: #{tpu_custom_call.1} parent=1 // pred_check_branch
      %319 = sbr.rel (0) target = $region25
    $region24: #{tpu_custom_call.1} parent=1 // pred_region
      %s321 = ssub.s32 1024, 1024
      %322 = vsyncadd [#allocation4], %s321
      %s323 = sshll.u32 [#allocation7], 4
      %s324 = int_to_ptr.vmem [resolvable:$true] %s323
      %329 = dma.vmem_to_hbm [thread:$0]  %s324, 1024, %s3, [#allocation4], 64, 64, 4
    $region25: #{tpu_custom_call.1} parent=1 // pred_fallthru
      _
    // Predicated region
    $region26: #{tpu_custom_call.1} parent=1 // pred_check
      _
    $region27: #{tpu_custom_call.1} parent=1 // pred_check_branch
      %331 = sbr.rel (0) target = $region29
    $region28: #{tpu_custom_call.1} parent=1 // pred_region
      _
    $region29: #{tpu_custom_call.1} parent=1 // pred_fallthru
      _
    // Predicated region
    $region30: #{tpu_custom_call.1} parent=1 // pred_check
      _
    $region31: #{tpu_custom_call.1} parent=1 // pred_check_branch
      %333 = sbr.rel (0) target = $region33
    $region32: #{tpu_custom_call.1} parent=1 // pred_region
      %334 = dma.done [#allocation4], 1024
    $region33: #{tpu_custom_call.1} parent=1 // pred_fallthru
      _
    %335 = vsyncpa [#allocation3], 1
    %336 = vsyncpa [#allocation6], 1
    %337 = vsyncpa [#allocation4], 1

</llo_original>
